<compile_context>
chip_gen: v5e
topology: v5e:2x2
jax: 0.10.0
libtpu: 0.0.40
codegen_flags: <defaults>
</compile_context>

<pallas_src>
import jax
import jax.numpy as jnp
import numpy as np
from jax.experimental import pallas as pl
from jax.experimental.pallas import tpu as pltpu

BN_EPS = 1e-5      # nn.BatchNorm2d default eps
NORM_EPS = 1e-12   # F.normalize default eps


def projector_fused_kernel(pT_ref, wconv_ref, gamma_ref, beta_ref,
                           wfc_ref, bfc_ref, o_ref):
    """Fused conv(3x3, im2col+MXU) -> BN(batch stats) -> ReLU -> FC -> L2 normalize.

    pT_ref    : (9*Cin, M)   im2col patches (already transposed); column m = n*H*W + h*W + w
    wconv_ref : (8, 9*Cin)   conv weight, k = (dh*3 + dw)*Cin + ci
    gamma_ref, beta_ref : (8, 1)
    wfc_ref   : (8*H*W, out) fc weight transposed; row f = c*H*W + h*W + w (PyTorch order)
    bfc_ref   : (1, out)
    o_ref     : (N, out)
    """
    _, M = pT_ref.shape
    Cout = wconv_ref.shape[0]          # 8
    F, _ = wfc_ref.shape
    S = F // Cout                      # H*W
    N = M // S                         # batch

    # ---- conv as one MXU matmul; channels in sublanes, flat spatial in lanes ----
    # (conv bias omitted: it cancels exactly under training-mode BatchNorm below)
    convT = jnp.dot(wconv_ref[...], pT_ref[...],
                    preferred_element_type=jnp.float32)          # (8, M), lane-dense

    # ---- BatchNorm2d, training-mode batch stats (biased var), single pass ----
    inv_m = 1.0 / M
    mean = jnp.sum(convT, axis=1, keepdims=True) * inv_m          # (8, 1)
    ex2 = jnp.sum(convT * convT, axis=1, keepdims=True) * inv_m   # (8, 1)
    var = jnp.maximum(ex2 - mean * mean, 0.0)
    scale = gamma_ref[...] * jax.lax.rsqrt(var + BN_EPS)          # (8, 1)
    shift = beta_ref[...] - mean * scale
    yT = jnp.maximum(convT * scale + shift, 0.0)                  # ReLU, (8, M)

    # ---- gather features for ALL samples in PyTorch (c, h, w) flatten order ----
    # Lane slices are 128-aligned (S = H*W = 256), so these are cheap vector moves.
    rows = []
    for n in range(N):
        rows.append(jnp.concatenate(
            [yT[c:c + 1, n * S:(n + 1) * S] for c in range(Cout)], axis=1))  # (1, 8*S)
    feats = jnp.concatenate(rows, axis=0)                          # (N, 8*S)

    # ---- FC: one MXU matmul for the whole batch, then batched L2 normalize ----
    z = jnp.dot(feats, wfc_ref[...],
                preferred_element_type=jnp.float32) + bfc_ref[...]  # (N, out)
    ss = jnp.sum(z * z, axis=1, keepdims=True)                       # (N, 1)
    # F.normalize: x / max(||x||, eps) == x * rsqrt(max(||x||^2, eps^2))
    o_ref[...] = z * jax.lax.rsqrt(jnp.maximum(ss, NORM_EPS * NORM_EPS))


def pack_params(params):
    """One-time parameter repacking (hoisted out of the per-forward path)."""
    w_conv = jnp.asarray(params["w_conv"])          # (8, Cin, 3, 3) OIHW
    cout, cin, kh, kw = w_conv.shape
    # (O, I, kh, kw) -> (O, kh, kw, I) -> (O, 9*Cin); k = (dh*3 + dw)*Cin + ci
    w_conv_k = jnp.transpose(w_conv, (0, 2, 3, 1)).reshape(cout, kh * kw * cin)
    return {
        "w_conv_k": w_conv_k,
        # conv bias intentionally NOT packed: it cancels under training-mode BN.
        "gamma_k": jnp.asarray(params["gamma"]).reshape(cout, 1),
        "beta_k": jnp.asarray(params["beta"]).reshape(cout, 1),
        # PyTorch fc weight is (out, 8*H*W) with features already in (c, h, w)
        # order -> a plain transpose is the packed (F, out) matrix.
        "w_fc_t": jnp.asarray(params["w_fc"]).T,
        "b_fc_k": jnp.asarray(params["b_fc"]).reshape(1, -1),
    }


@jax.jit
def projector_forward(x_nchw, packed):
    """Pallas implementation of Projector.forward. x_nchw: (N, Cin, H, W) float32."""
    N, Cin, H, W = x_nchw.shape
    out_dim = packed["w_fc_t"].shape[1]

    # ---- per-forward glue: build the im2col matrix already transposed ----
    # (Cin, N, Hp, Wp) channel-major pad; 9 tap slices -> (Cin, M) each;
    # concat along axis 0 gives (9*Cin, M) with row k = (dh*3 + dw)*Cin + ci
    # and column m = n*H*W + h*W + w.  No post-hoc transpose HLO.
    x_c = jnp.transpose(x_nchw, (1, 0, 2, 3))
    x_pad = jnp.pad(x_c, ((0, 0), (0, 0), (1, 1), (1, 1)))
    taps = [x_pad[:, :, dh:dh + H, dw:dw + W].reshape(Cin, N * H * W)
            for dh in range(3) for dw in range(3)]
    patches_t = jnp.concatenate(taps, axis=0)                     # (9*Cin, N*H*W)

    vmem = pl.BlockSpec(memory_space=pltpu.MemorySpace.VMEM)
    return pl.pallas_call(
        projector_fused_kernel,
        out_shape=jax.ShapeDtypeStruct((N, out_dim), jnp.float32),
        in_specs=[vmem] * 6,
        out_specs=vmem,
    )(patches_t, packed["w_conv_k"], packed["gamma_k"], packed["beta_k"],
      packed["w_fc_t"], packed["b_fc_k"])


def reference_forward(x, params):
    """Pure-JAX reference with PyTorch (NCHW) semantics."""
    conv = jax.lax.conv_general_dilated(
        x, params["w_conv"], window_strides=(1, 1), padding=((1, 1), (1, 1)),
        dimension_numbers=("NCHW", "OIHW", "NCHW"),
        precision=jax.lax.Precision.HIGHEST)
    conv = conv + params["b_conv"][None, :, None, None]
    mean = conv.mean(axis=(0, 2, 3), keepdims=True)
    var = jnp.square(conv - mean).mean(axis=(0, 2, 3), keepdims=True)
    y = (conv - mean) / jnp.sqrt(var + BN_EPS)
    y = y * params["gamma"][None, :, None, None] + params["beta"][None, :, None, None]
    y = jnp.maximum(y, 0.0)
    y = y.reshape(y.shape[0], -1)
    y = jnp.dot(y, params["w_fc"].T, precision=jax.lax.Precision.HIGHEST) + params["b_fc"]
    n = jnp.sqrt(jnp.sum(y * y, axis=1, keepdims=True))
    return y / jnp.maximum(n, NORM_EPS)


if __name__ == "__main__":
    # Small shapes consistent with Projector(output_size=32, c=4, size=16)
    N, Cin, size, out_dim = 2, 4, 16, 32

    key = jax.random.PRNGKey(0)
    ks = jax.random.split(key, 7)
    params = {
        "w_conv": 0.10 * jax.random.normal(ks[0], (8, Cin, 3, 3), jnp.float32),
        "b_conv": 0.10 * jax.random.normal(ks[1], (8,), jnp.float32),
        "gamma": 1.0 + 0.10 * jax.random.normal(ks[2], (8,), jnp.float32),
        "beta": 0.10 * jax.random.normal(ks[3], (8,), jnp.float32),
        "w_fc": 0.05 * jax.random.normal(ks[4], (out_dim, 8 * size * size), jnp.float32),
        "b_fc": 0.05 * jax.random.normal(ks[5], (out_dim,), jnp.float32),
    }
    x = jax.random.normal(ks[6], (N, Cin, size, size), jnp.float32)

    packed = pack_params(params)        # one-time repack (hoisted out of forward)
    out = projector_forward(x, packed)
    out = jax.block_until_ready(out)

    ref = reference_forward(x, params)
    assert out.shape == (N, out_dim), out.shape
    assert np.allclose(np.asarray(out), np.asarray(ref), atol=2e-3, rtol=2e-3), (
        np.max(np.abs(np.asarray(out) - np.asarray(ref))))
    print("KERNEL_OK")
</pallas_src>

<mosaic_0001>
module attributes {stable_mosaic.version = 11 : i64} {
  func.func @projector_fused_kernel(%arg0: memref<36x512xf32, #tpu.memory_space<vmem>>, %arg1: memref<8x36xf32, #tpu.memory_space<vmem>>, %arg2: memref<8x1xf32, #tpu.memory_space<vmem>>, %arg3: memref<8x1xf32, #tpu.memory_space<vmem>>, %arg4: memref<2048x32xf32, #tpu.memory_space<vmem>>, %arg5: memref<1x32xf32, #tpu.memory_space<vmem>>, %arg6: memref<2x32xf32, #tpu.memory_space<vmem>>) attributes {dimension_semantics = [], scalar_prefetch = 0 : i64, scratch_operands = 0 : i64, tpu.core_type = #tpu.core_type<tc>} {
    %c0 = arith.constant 0 : index
    %c0_0 = arith.constant 0 : index
    %0 = vector.load %arg1[%c0, %c0_0] : memref<8x36xf32, #tpu.memory_space<vmem>>, vector<8x36xf32>
    %c0_1 = arith.constant 0 : index
    %c0_2 = arith.constant 0 : index
    %1 = vector.load %arg0[%c0_1, %c0_2] : memref<36x512xf32, #tpu.memory_space<vmem>>, vector<36x512xf32>
    %cst = arith.constant dense<0.000000e+00> : vector<8x512xf32>
    %2 = tpu.matmul %0, %1, %cst {dimension_numbers = #tpu.dot_dimension_numbers<[1], [0], [0], [1], [0, 0, 1, 1], [], []>} : vector<8x36xf32>, vector<36x512xf32>, vector<8x512xf32> -> vector<8x512xf32>
    %cst_3 = arith.constant dense<0.000000e+00> : vector<8xf32>
    %3 = vector.multi_reduction <add>, %2, %cst_3 [1] : vector<8x512xf32> to vector<8xf32>
    %4 = vector.shape_cast %3 : vector<8xf32> to vector<8x1xf32>
    %cst_4 = arith.constant 0.001953125 : f32
    %5 = vector.broadcast %cst_4 : f32 to vector<8x1xf32>
    %6 = arith.mulf %4, %5 : vector<8x1xf32>
    %7 = arith.mulf %2, %2 : vector<8x512xf32>
    %cst_5 = arith.constant dense<0.000000e+00> : vector<8xf32>
    %8 = vector.multi_reduction <add>, %7, %cst_5 [1] : vector<8x512xf32> to vector<8xf32>
    %9 = vector.shape_cast %8 : vector<8xf32> to vector<8x1xf32>
    %cst_6 = arith.constant 0.001953125 : f32
    %10 = vector.broadcast %cst_6 : f32 to vector<8x1xf32>
    %11 = arith.mulf %9, %10 : vector<8x1xf32>
    %12 = arith.mulf %6, %6 : vector<8x1xf32>
    %13 = arith.subf %11, %12 : vector<8x1xf32>
    %cst_7 = arith.constant 0.000000e+00 : f32
    %14 = vector.broadcast %cst_7 : f32 to vector<8x1xf32>
    %15 = arith.maximumf %13, %14 : vector<8x1xf32>
    %c0_8 = arith.constant 0 : index
    %c0_9 = arith.constant 0 : index
    %16 = vector.load %arg2[%c0_8, %c0_9] : memref<8x1xf32, #tpu.memory_space<vmem>>, vector<8x1xf32>
    %cst_10 = arith.constant 9.99999974E-6 : f32
    %17 = vector.broadcast %cst_10 : f32 to vector<8x1xf32>
    %18 = arith.addf %15, %17 : vector<8x1xf32>
    %19 = math.rsqrt %18 : vector<8x1xf32>
    %20 = arith.mulf %16, %19 : vector<8x1xf32>
    %c0_11 = arith.constant 0 : index
    %c0_12 = arith.constant 0 : index
    %21 = vector.load %arg3[%c0_11, %c0_12] : memref<8x1xf32, #tpu.memory_space<vmem>>, vector<8x1xf32>
    %22 = arith.mulf %6, %20 : vector<8x1xf32>
    %23 = arith.subf %21, %22 : vector<8x1xf32>
    %24 = vector.broadcast %20 : vector<8x1xf32> to vector<8x512xf32>
    %25 = arith.mulf %2, %24 : vector<8x512xf32>
    %26 = vector.broadcast %23 : vector<8x1xf32> to vector<8x512xf32>
    %27 = arith.addf %25, %26 : vector<8x512xf32>
    %cst_13 = arith.constant 0.000000e+00 : f32
    %28 = vector.broadcast %cst_13 : f32 to vector<8x512xf32>
    %29 = arith.maximumf %27, %28 : vector<8x512xf32>
    %30 = vector.extract_strided_slice %29 {offsets = [0, 0], sizes = [1, 256], strides = [1, 1]} : vector<8x512xf32> to vector<1x256xf32>
    %31 = vector.extract_strided_slice %29 {offsets = [1, 0], sizes = [1, 256], strides = [1, 1]} : vector<8x512xf32> to vector<1x256xf32>
    %32 = vector.extract_strided_slice %29 {offsets = [2, 0], sizes = [1, 256], strides = [1, 1]} : vector<8x512xf32> to vector<1x256xf32>
    %33 = vector.extract_strided_slice %29 {offsets = [3, 0], sizes = [1, 256], strides = [1, 1]} : vector<8x512xf32> to vector<1x256xf32>
    %34 = vector.extract_strided_slice %29 {offsets = [4, 0], sizes = [1, 256], strides = [1, 1]} : vector<8x512xf32> to vector<1x256xf32>
    %35 = vector.extract_strided_slice %29 {offsets = [5, 0], sizes = [1, 256], strides = [1, 1]} : vector<8x512xf32> to vector<1x256xf32>
    %36 = vector.extract_strided_slice %29 {offsets = [6, 0], sizes = [1, 256], strides = [1, 1]} : vector<8x512xf32> to vector<1x256xf32>
    %37 = vector.extract_strided_slice %29 {offsets = [7, 0], sizes = [1, 256], strides = [1, 1]} : vector<8x512xf32> to vector<1x256xf32>
    %38 = tpu.concatenate %30, %31, %32, %33, %34, %35, %36, %37 in 1 : vector<1x256xf32>, vector<1x256xf32>, vector<1x256xf32>, vector<1x256xf32>, vector<1x256xf32>, vector<1x256xf32>, vector<1x256xf32>, vector<1x256xf32> -> vector<1x2048xf32>
    %39 = vector.extract_strided_slice %29 {offsets = [0, 256], sizes = [1, 256], strides = [1, 1]} : vector<8x512xf32> to vector<1x256xf32>
    %40 = vector.extract_strided_slice %29 {offsets = [1, 256], sizes = [1, 256], strides = [1, 1]} : vector<8x512xf32> to vector<1x256xf32>
    %41 = vector.extract_strided_slice %29 {offsets = [2, 256], sizes = [1, 256], strides = [1, 1]} : vector<8x512xf32> to vector<1x256xf32>
    %42 = vector.extract_strided_slice %29 {offsets = [3, 256], sizes = [1, 256], strides = [1, 1]} : vector<8x512xf32> to vector<1x256xf32>
    %43 = vector.extract_strided_slice %29 {offsets = [4, 256], sizes = [1, 256], strides = [1, 1]} : vector<8x512xf32> to vector<1x256xf32>
    %44 = vector.extract_strided_slice %29 {offsets = [5, 256], sizes = [1, 256], strides = [1, 1]} : vector<8x512xf32> to vector<1x256xf32>
    %45 = vector.extract_strided_slice %29 {offsets = [6, 256], sizes = [1, 256], strides = [1, 1]} : vector<8x512xf32> to vector<1x256xf32>
    %46 = vector.extract_strided_slice %29 {offsets = [7, 256], sizes = [1, 256], strides = [1, 1]} : vector<8x512xf32> to vector<1x256xf32>
    %47 = tpu.concatenate %39, %40, %41, %42, %43, %44, %45, %46 in 1 : vector<1x256xf32>, vector<1x256xf32>, vector<1x256xf32>, vector<1x256xf32>, vector<1x256xf32>, vector<1x256xf32>, vector<1x256xf32>, vector<1x256xf32> -> vector<1x2048xf32>
    %48 = tpu.concatenate %38, %47 in 0 : vector<1x2048xf32>, vector<1x2048xf32> -> vector<2x2048xf32>
    %c0_14 = arith.constant 0 : index
    %c0_15 = arith.constant 0 : index
    %49 = vector.load %arg4[%c0_14, %c0_15] : memref<2048x32xf32, #tpu.memory_space<vmem>>, vector<2048x32xf32>
    %cst_16 = arith.constant dense<0.000000e+00> : vector<2x32xf32>
    %50 = tpu.matmul %48, %49, %cst_16 {dimension_numbers = #tpu.dot_dimension_numbers<[1], [0], [0], [1], [0, 0, 1, 1], [], []>} : vector<2x2048xf32>, vector<2048x32xf32>, vector<2x32xf32> -> vector<2x32xf32>
    %c0_17 = arith.constant 0 : index
    %c0_18 = arith.constant 0 : index
    %51 = vector.load %arg5[%c0_17, %c0_18] : memref<1x32xf32, #tpu.memory_space<vmem>>, vector<1x32xf32>
    %52 = vector.broadcast %51 : vector<1x32xf32> to vector<2x32xf32>
    %53 = arith.addf %50, %52 : vector<2x32xf32>
    %54 = arith.mulf %53, %53 : vector<2x32xf32>
    %cst_19 = arith.constant dense<0.000000e+00> : vector<2xf32>
    %55 = vector.multi_reduction <add>, %54, %cst_19 [1] : vector<2x32xf32> to vector<2xf32>
    %56 = vector.shape_cast %55 : vector<2xf32> to vector<2x1xf32>
    %cst_20 = arith.constant 1.000000e-24 : f32
    %57 = vector.broadcast %cst_20 : f32 to vector<2x1xf32>
    %58 = arith.maximumf %56, %57 : vector<2x1xf32>
    %59 = math.rsqrt %58 : vector<2x1xf32>
    %60 = vector.broadcast %59 : vector<2x1xf32> to vector<2x32xf32>
    %61 = arith.mulf %53, %60 : vector<2x32xf32>
    %c0_21 = arith.constant 0 : index
    %c0_22 = arith.constant 0 : index
    %62 = vector.load %arg6[%c0_21, %c0_22] : memref<2x32xf32, #tpu.memory_space<vmem>>, vector<2x32xf32>
    tpu.vector_store %arg6[%c0_21, %c0_22], %61 {strides = array<i32>} : memref<2x32xf32, #tpu.memory_space<vmem>>, vector<2x32xf32>,
    return
  }
}

</mosaic_0001>

<llo_original>
// kernel: projector_forward.1
$region0: #{projector_forward.1}
  #allocation0 [shape = 'u32[]', space=smem, size = 0x4, offset = 0x4, fixed_abs, tag = 'smem constant byte address 0x4 - core index']
  #allocation1 [shape = 'u32[72,128]{1,0:T(1,128)}', space=vmem, size = 0x9000, scoped, tag = 'internal scratch']
  %s0 = inlined_call_operand.vmem [shape: f32[36,512], index: 0, kind: input, shape index: {}]
  %s1 = inlined_call_operand.vmem [shape: f32[8,36], index: 1, kind: input, shape index: {}]
  %s2 = inlined_call_operand.vmem [shape: f32[8,1], index: 2, kind: input, shape index: {}]
  %s3 = inlined_call_operand.vmem [shape: f32[8,1], index: 3, kind: input, shape index: {}]
  %s4 = inlined_call_operand.vmem [shape: f32[2048,32], index: 4, kind: input, shape index: {}]
  %s5 = inlined_call_operand.vmem [shape: f32[1,32], index: 5, kind: input, shape index: {}]
  %s6 = inlined_call_operand.hbm [shape: f32[2,32], index: 6, kind: output, shape index: {}]
  %s7 = sld [smem:[#allocation0]]
  $region34: #{projector_forward.1} parent=0
    _
  %s9 = ssub.s32 1, %s7
  %s10 = scalar_select 0, %s9, %s7
  $region1: #{projector_forward.1} parent=0
    #allocation2 [shape = 'u8[1024]{0}', space=vmem, size = 0x400, scoped, tag = 'output window, operand 0, single buffered']
    #allocation3 [shape = 's32[1]{0}', space=sflag, size = 0x4, scoped, tag = 'scoped memory for projector_forward.1']
    %11 = vsyncpa [#allocation3], 0
    // Predicated region
    $region2: #{projector_forward.1} parent=1 // pred_check
      _
    $region3: #{projector_forward.1} parent=1 // pred_check_branch
      %13 = sbr.rel (0) target = $region5
    $region4: #{projector_forward.1} parent=1 // pred_region
      _
    $region5: #{projector_forward.1} parent=1 // pred_fallthru
      _
    // Predicated region
    $region6: #{projector_forward.1} parent=1 // pred_check
      _
    $region7: #{projector_forward.1} parent=1 // pred_check_branch
      %15 = sbr.rel (0) target = $region9
    $region8: #{projector_forward.1} parent=1 // pred_region
      _
    $region9: #{projector_forward.1} parent=1 // pred_fallthru
      _
    // Predicated region
    $region10: #{projector_forward.1} parent=1 // pred_check
      _
    $region11: #{projector_forward.1} parent=1 // pred_check_branch
      %17 = sbr.rel (0) target = $region13
    $region12: #{projector_forward.1} parent=1 // pred_region
      _
    $region13: #{projector_forward.1} parent=1 // pred_fallthru
      _
    // Predicated region
    $region14: #{projector_forward.1} parent=1 // pred_check
      _
    $region15: #{projector_forward.1} parent=1 // pred_check_branch
      %19 = sbr.rel (0) target = $region17
    $region16: #{projector_forward.1} parent=1 // pred_region
      _
    $region17: #{projector_forward.1} parent=1 // pred_fallthru
      _
    // Predicated region
    $region18: #{projector_forward.1} parent=1 // pred_check
      _
    $region19: #{projector_forward.1} parent=1 // pred_check_branch
      %21 = sbr.rel (0) target = $region21
    $region20: #{projector_forward.1} parent=1 // pred_region
      _
    $region21: #{projector_forward.1} parent=1 // pred_fallthru
      _
    // Predicated region
    $region22: #{projector_forward.1} parent=1 // pred_check
      _
    $region23: #{projector_forward.1} parent=1 // pred_check_branch
      %23 = sbr.rel (0) target = $region25
    $region24: #{projector_forward.1} parent=1 // pred_region
      _
    $region25: #{projector_forward.1} parent=1 // pred_fallthru
      _
    %v24 = vld [vmem:[%s1] sm:$0xff]
    %v25 = vld [vmem:[%s0] sm:$0xff]
    %v26 = vld [vmem:[%s0 + $0x8] sm:$0xff]
    %v27 = vld [vmem:[%s0 + $0x10] sm:$0xff]
    %v28 = vld [vmem:[%s0 + $0x18] sm:$0xff]
    %v29 = vld [vmem:[%s0 + $0x20] sm:$0xff]
    %v30 = vld [vmem:[%s0 + $0x28] sm:$0xff]
    %v31 = vld [vmem:[%s0 + $0x30] sm:$0xff]
    %v32 = vld [vmem:[%s0 + $0x38] sm:$0xff]
    %v33 = vld [vmem:[%s0 + $0x40] sm:$0xff]
    %v34 = vld [vmem:[%s0 + $0x48] sm:$0xff]
    %v35 = vld [vmem:[%s0 + $0x50] sm:$0xff]
    %v36 = vld [vmem:[%s0 + $0x58] sm:$0xff]
    %v37 = vld [vmem:[%s0 + $0x60] sm:$0xff]
    %v38 = vld [vmem:[%s0 + $0x68] sm:$0xff]
    %v39 = vld [vmem:[%s0 + $0x70] sm:$0xff]
    %v40 = vld [vmem:[%s0 + $0x78] sm:$0xff]
    %v41 = vld [vmem:[%s0 + $0x80] sm:$0xf]
    %v42 = vld [vmem:[%s0 + $0x88] sm:$0xf]
    %v43 = vld [vmem:[%s0 + $0x90] sm:$0xf]
    %v44 = vld [vmem:[%s0 + $0x98] sm:$0xf]
    %vm45 = vcmask 293888
    %v47 = vsel %vm45, %v24, 0
    %vm49 = vcmask 1043456
    %v51 = vsel %vm49, %v41, 0
    %v54 = vsel %vm49, %v42, 0
    %v57 = vsel %vm49, %v43, 0
    %v60 = vsel %vm49, %v44, 0
    %62 = vmatpush.msra.mxu0 0.0
    %63 = vmatpush.msra.mxu0 0.0
    %64 = vmatpush.msra.mxu0 0.0
    %65 = vmatpush.msra.mxu0 0.0
    %66 = vmatpush.msra.mxu0 0.0
    %67 = vmatpush.msra.mxu0 0.0
    %68 = vmatpush.msra.mxu0 0.0
    %69 = vmatpush.msra.mxu0 0.0
    %70 = vmatpush.msra.mxu0 0.0
    %71 = vmatpush.msra.mxu0 0.0
    %72 = vmatpush.msra.mxu0 0.0
    %73 = vmatpush.msra.mxu0 %v51
    %74 = vmatpush.msra.mxu0 %v37
    %75 = vmatpush.msra.mxu0 %v33
    %76 = vmatpush.msra.mxu0 %v29
    %77 = vmatpush.msra.mxu0 %v25
    %78 = vmatmul.f32.gmra.mxu0 %v47
    %v79 = vpop.f32.mrf.mxu0
    %v80 = vadd.f32 0.0, %v79
    %81 = vdwg.mxu0
    %82 = vmatpush.msra.mxu0 0.0
    %83 = vmatpush.msra.mxu0 0.0
    %84 = vmatpush.msra.mxu0 0.0
    %85 = vmatpush.msra.mxu0 0.0
    %86 = vmatpush.msra.mxu0 0.0
    %87 = vmatpush.msra.mxu0 0.0
    %88 = vmatpush.msra.mxu0 0.0
    %89 = vmatpush.msra.mxu0 0.0
    %90 = vmatpush.msra.mxu0 0.0
    %91 = vmatpush.msra.mxu0 0.0
    %92 = vmatpush.msra.mxu0 0.0
    %93 = vmatpush.msra.mxu0 %v54
    %94 = vmatpush.msra.mxu0 %v38
    %95 = vmatpush.msra.mxu0 %v34
    %96 = vmatpush.msra.mxu0 %v30
    %97 = vmatpush.msra.mxu0 %v26
    %98 = vmatmul.f32.gmra.mxu0 %v47
    %v99 = vpop.f32.mrf.mxu0
    %v100 = vadd.f32 0.0, %v99
    %101 = vdwg.mxu0
    %102 = vmatpush.msra.mxu0 0.0
    %103 = vmatpush.msra.mxu0 0.0
    %104 = vmatpush.msra.mxu0 0.0
    %105 = vmatpush.msra.mxu0 0.0
    %106 = vmatpush.msra.mxu0 0.0
    %107 = vmatpush.msra.mxu0 0.0
    %108 = vmatpush.msra.mxu0 0.0
    %109 = vmatpush.msra.mxu0 0.0
    %110 = vmatpush.msra.mxu0 0.0
    %111 = vmatpush.msra.mxu0 0.0
    %112 = vmatpush.msra.mxu0 0.0
    %113 = vmatpush.msra.mxu0 %v57
    %114 = vmatpush.msra.mxu0 %v39
    %115 = vmatpush.msra.mxu0 %v35
    %116 = vmatpush.msra.mxu0 %v31
    %117 = vmatpush.msra.mxu0 %v27
    %118 = vmatmul.f32.gmra.mxu0 %v47
    %v119 = vpop.f32.mrf.mxu0
    %v120 = vadd.f32 0.0, %v119
    %121 = vdwg.mxu0
    %122 = vmatpush.msra.mxu0 0.0
    %123 = vmatpush.msra.mxu0 0.0
    %124 = vmatpush.msra.mxu0 0.0
    %125 = vmatpush.msra.mxu0 0.0
    %126 = vmatpush.msra.mxu0 0.0
    %127 = vmatpush.msra.mxu0 0.0
    %128 = vmatpush.msra.mxu0 0.0
    %129 = vmatpush.msra.mxu0 0.0
    %130 = vmatpush.msra.mxu0 0.0
    %131 = vmatpush.msra.mxu0 0.0
    %132 = vmatpush.msra.mxu0 0.0
    %133 = vmatpush.msra.mxu0 %v60
    %134 = vmatpush.msra.mxu0 %v40
    %135 = vmatpush.msra.mxu0 %v36
    %136 = vmatpush.msra.mxu0 %v32
    %137 = vmatpush.msra.mxu0 %v28
    %138 = vmatmul.f32.gmra.mxu0 %v47
    %v139 = vpop.f32.mrf.mxu0
    %v140 = vadd.f32 0.0, %v139
    %141 = vdwg.mxu0
    %v142 = vadd.f32 %v80, %v100
    %v143 = vadd.f32 %v142, %v120
    %v144 = vadd.f32 %v143, %v140
    %145 = vadd.xlane.f32.xlu0 %v144
    %v146 = vpop.xlane.xlu0 %145
    %v147 = vmul.f32 %v146, 0.001953125
    %v148 = vmul.f32 %v80, %v80
    %v149 = vmul.f32 %v100, %v100
    %v150 = vmul.f32 %v120, %v120
    %v151 = vmul.f32 %v140, %v140
    %v152 = vadd.f32 %v148, %v149
    %v153 = vadd.f32 %v152, %v150
    %v154 = vadd.f32 %v153, %v151
    %155 = vadd.xlane.f32.xlu0 %v154
    %v156 = vpop.xlane.xlu0 %155
    %v157 = vmul.f32 %v156, 0.001953125
    %v158 = vmul.f32 %v147, %v147
    %v159 = vsub.f32 %v157, %v158
    %v160 = vmax.f32 %v159, 0.0
    %v161 = vld [vmem:[%s2] sm:$0xff]
    %v162 = vadd.f32 %v160, 1e-05
    %v163 = vrsqrt.pop %v162
    %v164 = vmul.f32 %v163, %v162
    %v165 = vmul.f32 %v164, %v163
    %v166 = vmul.f32 0.5, %v165
    %v167 = vsub.f32 1.5, %v166
    %v168 = vmul.f32 %v163, %v167
    %vm169 = vweird.f32 %v162
    %vm170 = vweird.f32 %v163
    %vm171 = vmor %vm169, %vm170
    %v172 = vsel %vm171, %v163, %v168
    %v173 = vmul.f32 %v161, %v172
    %v174 = vld [vmem:[%s3] sm:$0xff]
    %v175 = vmul.f32 %v147, %v173
    %v176 = vsub.f32 %v174, %v175
    %178 = vset.pattern.permute.xlu0 0
    %179 = vperm.xlu0 %178, %v173
    %v180 = vpop.permute.xlu0 %179
    %v182 = vmul.f32 %v80, %v180
    %v183 = vmul.f32 %v100, %v180
    %v184 = vmul.f32 %v120, %v180
    %v185 = vmul.f32 %v140, %v180
    %187 = vset.pattern.permute.xlu0 0
    %188 = vperm.xlu0 %187, %v176
    %v189 = vpop.permute.xlu0 %188
    %v191 = vadd.f32 %v182, %v189
    %v192 = vadd.f32 %v183, %v189
    %v193 = vadd.f32 %v184, %v189
    %v194 = vadd.f32 %v185, %v189
    %v195 = vmax.f32 %v191, 0.0
    %v196 = vmax.f32 %v192, 0.0
    %v197 = vmax.f32 %v193, 0.0
    %v198 = vmax.f32 %v194, 0.0
    %v201 = vrot.slane %v195, 1
    %v202 = vrot.slane %v196, 1
    %v205 = vrot.slane %v195, 2
    %v206 = vrot.slane %v196, 2
    %v209 = vrot.slane %v195, 3
    %v210 = vrot.slane %v196, 3
    %v213 = vrot.slane %v195, 4
    %v214 = vrot.slane %v196, 4
    %v217 = vrot.slane %v195, 5
    %v218 = vrot.slane %v196, 5
    %v221 = vrot.slane %v195, 6
    %v222 = vrot.slane %v196, 6
    %v225 = vrot.slane %v195, 7
    %v226 = vrot.slane %v196, 7
    %v231 = vrot.slane %v197, 1
    %v232 = vrot.slane %v198, 1
    %v233 = vrot.slane %v197, 2
    %v234 = vrot.slane %v198, 2
    %v235 = vrot.slane %v197, 3
    %v236 = vrot.slane %v198, 3
    %v237 = vrot.slane %v197, 4
    %v238 = vrot.slane %v198, 4
    %v239 = vrot.slane %v197, 5
    %v240 = vrot.slane %v198, 5
    %v241 = vrot.slane %v197, 6
    %v242 = vrot.slane %v198, 6
    %v243 = vrot.slane %v197, 7
    %v244 = vrot.slane %v198, 7
    %v245 = vrot.slane %v231, 7
    %v246 = vrot.slane %v232, 7
    %v247 = vrot.slane %v233, 7
    %v248 = vrot.slane %v234, 7
    %v249 = vrot.slane %v235, 7
    %v250 = vrot.slane %v236, 7
    %v251 = vrot.slane %v237, 7
    %v252 = vrot.slane %v238, 7
    %v253 = vrot.slane %v239, 7
    %v254 = vrot.slane %v240, 7
    %v255 = vrot.slane %v241, 7
    %v256 = vrot.slane %v242, 7
    %v257 = vrot.slane %v243, 7
    %v258 = vrot.slane %v244, 7
    %vm275 = vcmask 1040384
    %v276 = vsel %vm275, %v195, %v243
    %v277 = vsel %vm275, %v196, %v244
    %v278 = vsel %vm275, %v201, %v245
    %v279 = vsel %vm275, %v202, %v246
    %v280 = vsel %vm275, %v205, %v247
    %v281 = vsel %vm275, %v206, %v248
    %v282 = vsel %vm275, %v209, %v249
    %v283 = vsel %vm275, %v210, %v250
    %v284 = vsel %vm275, %v213, %v251
    %v285 = vsel %vm275, %v214, %v252
    %v286 = vsel %vm275, %v217, %v253
    %v287 = vsel %vm275, %v218, %v254
    %v288 = vsel %vm275, %v221, %v255
    %v289 = vsel %vm275, %v222, %v256
    %v290 = vsel %vm275, %v225, %v257
    %v291 = vsel %vm275, %v226, %v258
    %v292 = vld [vmem:[%s4] sm:$0xff]
    %v293 = vld [vmem:[%s4 + $0x8] sm:$0xff]
    %v294 = vld [vmem:[%s4 + $0x10] sm:$0xff]
    %v295 = vld [vmem:[%s4 + $0x18] sm:$0xff]
    %v296 = vld [vmem:[%s4 + $0x20] sm:$0xff]
    %v297 = vld [vmem:[%s4 + $0x28] sm:$0xff]
    %v298 = vld [vmem:[%s4 + $0x30] sm:$0xff]
    %v299 = vld [vmem:[%s4 + $0x38] sm:$0xff]
    %v300 = vld [vmem:[%s4 + $0x40] sm:$0xff]
    %v301 = vld [vmem:[%s4 + $0x48] sm:$0xff]
    %v302 = vld [vmem:[%s4 + $0x50] sm:$0xff]
    %v303 = vld [vmem:[%s4 + $0x58] sm:$0xff]
    %v304 = vld [vmem:[%s4 + $0x60] sm:$0xff]
    %v305 = vld [vmem:[%s4 + $0x68] sm:$0xff]
    %v306 = vld [vmem:[%s4 + $0x70] sm:$0xff]
    %v307 = vld [vmem:[%s4 + $0x78] sm:$0xff]
    %v308 = vld [vmem:[%s4 + $0x80] sm:$0xff]
    %v309 = vld [vmem:[%s4 + $0x88] sm:$0xff]
    %v310 = vld [vmem:[%s4 + $0x90] sm:$0xff]
    %v311 = vld [vmem:[%s4 + $0x98] sm:$0xff]
    %v312 = vld [vmem:[%s4 + $0xa0] sm:$0xff]
    %v313 = vld [vmem:[%s4 + $0xa8] sm:$0xff]
    %v314 = vld [vmem:[%s4 + $0xb0] sm:$0xff]
    %v315 = vld [vmem:[%s4 + $0xb8] sm:$0xff]
    %v316 = vld [vmem:[%s4 + $0xc0] sm:$0xff]
    %v317 = vld [vmem:[%s4 + $0xc8] sm:$0xff]
    %v318 = vld [vmem:[%s4 + $0xd0] sm:$0xff]
    %v319 = vld [vmem:[%s4 + $0xd8] sm:$0xff]
    %v320 = vld [vmem:[%s4 + $0xe0] sm:$0xff]
    %v321 = vld [vmem:[%s4 + $0xe8] sm:$0xff]
    %v322 = vld [vmem:[%s4 + $0xf0] sm:$0xff]
    %v323 = vld [vmem:[%s4 + $0xf8] sm:$0xff]
    %v324 = vld [vmem:[%s4 + $0x100] sm:$0xff]
    %v325 = vld [vmem:[%s4 + $0x108] sm:$0xff]
    %v326 = vld [vmem:[%s4 + $0x110] sm:$0xff]
    %v327 = vld [vmem:[%s4 + $0x118] sm:$0xff]
    %v328 = vld [vmem:[%s4 + $0x120] sm:$0xff]
    %v329 = vld [vmem:[%s4 + $0x128] sm:$0xff]
    %v330 = vld [vmem:[%s4 + $0x130] sm:$0xff]
    %v331 = vld [vmem:[%s4 + $0x138] sm:$0xff]
    %v332 = vld [vmem:[%s4 + $0x140] sm:$0xff]
    %v333 = vld [vmem:[%s4 + $0x148] sm:$0xff]
    %v334 = vld [vmem:[%s4 + $0x150] sm:$0xff]
    %v335 = vld [vmem:[%s4 + $0x158] sm:$0xff]
    %v336 = vld [vmem:[%s4 + $0x160] sm:$0xff]
    %v337 = vld [vmem:[%s4 + $0x168] sm:$0xff]
    %v338 = vld [vmem:[%s4 + $0x170] sm:$0xff]
    %v339 = vld [vmem:[%s4 + $0x178] sm:$0xff]
    %v340 = vld [vmem:[%s4 + $0x180] sm:$0xff]
    %v341 = vld [vmem:[%s4 + $0x188] sm:$0xff]
    %v342 = vld [vmem:[%s4 + $0x190] sm:$0xff]
    %v343 = vld [vmem:[%s4 + $0x198] sm:$0xff]
    %v344 = vld [vmem:[%s4 + $0x1a0] sm:$0xff]
    %v345 = vld [vmem:[%s4 + $0x1a8] sm:$0xff]
    %v346 = vld [vmem:[%s4 + $0x1b0] sm:$0xff]
    %v347 = vld [vmem:[%s4 + $0x1b8] sm:$0xff]
    %v348 = vld [vmem:[%s4 + $0x1c0] sm:$0xff]
    %v349 = vld [vmem:[%s4 + $0x1c8] sm:$0xff]
    %v350 = vld [vmem:[%s4 + $0x1d0] sm:$0xff]
    %v351 = vld [vmem:[%s4 + $0x1d8] sm:$0xff]
    %v352 = vld [vmem:[%s4 + $0x1e0] sm:$0xff]
    %v353 = vld [vmem:[%s4 + $0x1e8] sm:$0xff]
    %v354 = vld [vmem:[%s4 + $0x1f0] sm:$0xff]
    %v355 = vld [vmem:[%s4 + $0x1f8] sm:$0xff]
    %v356 = vld [vmem:[%s4 + $0x200] sm:$0xff]
    %v357 = vld [vmem:[%s4 + $0x208] sm:$0xff]
    %v358 = vld [vmem:[%s4 + $0x210] sm:$0xff]
    %v359 = vld [vmem:[%s4 + $0x218] sm:$0xff]
    %v360 = vld [vmem:[%s4 + $0x220] sm:$0xff]
    %v361 = vld [vmem:[%s4 + $0x228] sm:$0xff]
    %v362 = vld [vmem:[%s4 + $0x230] sm:$0xff]
    %v363 = vld [vmem:[%s4 + $0x238] sm:$0xff]
    %v364 = vld [vmem:[%s4 + $0x240] sm:$0xff]
    %v365 = vld [vmem:[%s4 + $0x248] sm:$0xff]
    %v366 = vld [vmem:[%s4 + $0x250] sm:$0xff]
    %v367 = vld [vmem:[%s4 + $0x258] sm:$0xff]
    %v368 = vld [vmem:[%s4 + $0x260] sm:$0xff]
    %v369 = vld [vmem:[%s4 + $0x268] sm:$0xff]
    %v370 = vld [vmem:[%s4 + $0x270] sm:$0xff]
    %v371 = vld [vmem:[%s4 + $0x278] sm:$0xff]
    %v372 = vld [vmem:[%s4 + $0x280] sm:$0xff]
    %v373 = vld [vmem:[%s4 + $0x288] sm:$0xff]
    %v374 = vld [vmem:[%s4 + $0x290] sm:$0xff]
    %v375 = vld [vmem:[%s4 + $0x298] sm:$0xff]
    %v376 = vld [vmem:[%s4 + $0x2a0] sm:$0xff]
    %v377 = vld [vmem:[%s4 + $0x2a8] sm:$0xff]
    %v378 = vld [vmem:[%s4 + $0x2b0] sm:$0xff]
    %v379 = vld [vmem:[%s4 + $0x2b8] sm:$0xff]
    %v380 = vld [vmem:[%s4 + $0x2c0] sm:$0xff]
    %v381 = vld [vmem:[%s4 + $0x2c8] sm:$0xff]
    %v382 = vld [vmem:[%s4 + $0x2d0] sm:$0xff]
    %v383 = vld [vmem:[%s4 + $0x2d8] sm:$0xff]
    %v384 = vld [vmem:[%s4 + $0x2e0] sm:$0xff]
    %v385 = vld [vmem:[%s4 + $0x2e8] sm:$0xff]
    %v386 = vld [vmem:[%s4 + $0x2f0] sm:$0xff]
    %v387 = vld [vmem:[%s4 + $0x2f8] sm:$0xff]
    %v388 = vld [vmem:[%s4 + $0x300] sm:$0xff]
    %v389 = vld [vmem:[%s4 + $0x308] sm:$0xff]
    %v390 = vld [vmem:[%s4 + $0x310] sm:$0xff]
    %v391 = vld [vmem:[%s4 + $0x318] sm:$0xff]
    %v392 = vld [vmem:[%s4 + $0x320] sm:$0xff]
    %v393 = vld [vmem:[%s4 + $0x328] sm:$0xff]
    %v394 = vld [vmem:[%s4 + $0x330] sm:$0xff]
    %v395 = vld [vmem:[%s4 + $0x338] sm:$0xff]
    %v396 = vld [vmem:[%s4 + $0x340] sm:$0xff]
    %v397 = vld [vmem:[%s4 + $0x348] sm:$0xff]
    %v398 = vld [vmem:[%s4 + $0x350] sm:$0xff]
    %v399 = vld [vmem:[%s4 + $0x358] sm:$0xff]
    %v400 = vld [vmem:[%s4 + $0x360] sm:$0xff]
    %v401 = vld [vmem:[%s4 + $0x368] sm:$0xff]
    %v402 = vld [vmem:[%s4 + $0x370] sm:$0xff]
    %v403 = vld [vmem:[%s4 + $0x378] sm:$0xff]
    %v404 = vld [vmem:[%s4 + $0x380] sm:$0xff]
    %v405 = vld [vmem:[%s4 + $0x388] sm:$0xff]
    %v406 = vld [vmem:[%s4 + $0x390] sm:$0xff]
    %v407 = vld [vmem:[%s4 + $0x398] sm:$0xff]
    %v408 = vld [vmem:[%s4 + $0x3a0] sm:$0xff]
    %v409 = vld [vmem:[%s4 + $0x3a8] sm:$0xff]
    %v410 = vld [vmem:[%s4 + $0x3b0] sm:$0xff]
    %v411 = vld [vmem:[%s4 + $0x3b8] sm:$0xff]
    %v412 = vld [vmem:[%s4 + $0x3c0] sm:$0xff]
    %v413 = vld [vmem:[%s4 + $0x3c8] sm:$0xff]
    %v414 = vld [vmem:[%s4 + $0x3d0] sm:$0xff]
    %v415 = vld [vmem:[%s4 + $0x3d8] sm:$0xff]
    %v416 = vld [vmem:[%s4 + $0x3e0] sm:$0xff]
    %v417 = vld [vmem:[%s4 + $0x3e8] sm:$0xff]
    %v418 = vld [vmem:[%s4 + $0x3f0] sm:$0xff]
    %v419 = vld [vmem:[%s4 + $0x3f8] sm:$0xff]
    %v420 = vld [vmem:[%s4 + $0x400] sm:$0xff]
    %v421 = vld [vmem:[%s4 + $0x408] sm:$0xff]
    %v422 = vld [vmem:[%s4 + $0x410] sm:$0xff]
    %v423 = vld [vmem:[%s4 + $0x418] sm:$0xff]
    %v424 = vld [vmem:[%s4 + $0x420] sm:$0xff]
    %v425 = vld [vmem:[%s4 + $0x428] sm:$0xff]
    %v426 = vld [vmem:[%s4 + $0x430] sm:$0xff]
    %v427 = vld [vmem:[%s4 + $0x438] sm:$0xff]
    %v428 = vld [vmem:[%s4 + $0x440] sm:$0xff]
    %v429 = vld [vmem:[%s4 + $0x448] sm:$0xff]
    %v430 = vld [vmem:[%s4 + $0x450] sm:$0xff]
    %v431 = vld [vmem:[%s4 + $0x458] sm:$0xff]
    %v432 = vld [vmem:[%s4 + $0x460] sm:$0xff]
    %v433 = vld [vmem:[%s4 + $0x468] sm:$0xff]
    %v434 = vld [vmem:[%s4 + $0x470] sm:$0xff]
    %v435 = vld [vmem:[%s4 + $0x478] sm:$0xff]
    %v436 = vld [vmem:[%s4 + $0x480] sm:$0xff]
    %v437 = vld [vmem:[%s4 + $0x488] sm:$0xff]
    %v438 = vld [vmem:[%s4 + $0x490] sm:$0xff]
    %v439 = vld [vmem:[%s4 + $0x498] sm:$0xff]
    %v440 = vld [vmem:[%s4 + $0x4a0] sm:$0xff]
    %v441 = vld [vmem:[%s4 + $0x4a8] sm:$0xff]
    %v442 = vld [vmem:[%s4 + $0x4b0] sm:$0xff]
    %v443 = vld [vmem:[%s4 + $0x4b8] sm:$0xff]
    %v444 = vld [vmem:[%s4 + $0x4c0] sm:$0xff]
    %v445 = vld [vmem:[%s4 + $0x4c8] sm:$0xff]
    %v446 = vld [vmem:[%s4 + $0x4d0] sm:$0xff]
    %v447 = vld [vmem:[%s4 + $0x4d8] sm:$0xff]
    %v448 = vld [vmem:[%s4 + $0x4e0] sm:$0xff]
    %v449 = vld [vmem:[%s4 + $0x4e8] sm:$0xff]
    %v450 = vld [vmem:[%s4 + $0x4f0] sm:$0xff]
    %v451 = vld [vmem:[%s4 + $0x4f8] sm:$0xff]
    %v452 = vld [vmem:[%s4 + $0x500] sm:$0xff]
    %v453 = vld [vmem:[%s4 + $0x508] sm:$0xff]
    %v454 = vld [vmem:[%s4 + $0x510] sm:$0xff]
    %v455 = vld [vmem:[%s4 + $0x518] sm:$0xff]
    %v456 = vld [vmem:[%s4 + $0x520] sm:$0xff]
    %v457 = vld [vmem:[%s4 + $0x528] sm:$0xff]
    %v458 = vld [vmem:[%s4 + $0x530] sm:$0xff]
    %v459 = vld [vmem:[%s4 + $0x538] sm:$0xff]
    %v460 = vld [vmem:[%s4 + $0x540] sm:$0xff]
    %v461 = vld [vmem:[%s4 + $0x548] sm:$0xff]
    %v462 = vld [vmem:[%s4 + $0x550] sm:$0xff]
    %v463 = vld [vmem:[%s4 + $0x558] sm:$0xff]
    %v464 = vld [vmem:[%s4 + $0x560] sm:$0xff]
    %v465 = vld [vmem:[%s4 + $0x568] sm:$0xff]
    %v466 = vld [vmem:[%s4 + $0x570] sm:$0xff]
    %v467 = vld [vmem:[%s4 + $0x578] sm:$0xff]
    %v468 = vld [vmem:[%s4 + $0x580] sm:$0xff]
    %v469 = vld [vmem:[%s4 + $0x588] sm:$0xff]
    %v470 = vld [vmem:[%s4 + $0x590] sm:$0xff]
    %v471 = vld [vmem:[%s4 + $0x598] sm:$0xff]
    %v472 = vld [vmem:[%s4 + $0x5a0] sm:$0xff]
    %v473 = vld [vmem:[%s4 + $0x5a8] sm:$0xff]
    %v474 = vld [vmem:[%s4 + $0x5b0] sm:$0xff]
    %v475 = vld [vmem:[%s4 + $0x5b8] sm:$0xff]
    %v476 = vld [vmem:[%s4 + $0x5c0] sm:$0xff]
    %v477 = vld [vmem:[%s4 + $0x5c8] sm:$0xff]
    %v478 = vld [vmem:[%s4 + $0x5d0] sm:$0xff]
    %v479 = vld [vmem:[%s4 + $0x5d8] sm:$0xff]
    %v480 = vld [vmem:[%s4 + $0x5e0] sm:$0xff]
    %v481 = vld [vmem:[%s4 + $0x5e8] sm:$0xff]
    %v482 = vld [vmem:[%s4 + $0x5f0] sm:$0xff]
    %v483 = vld [vmem:[%s4 + $0x5f8] sm:$0xff]
    %v484 = vld [vmem:[%s4 + $0x600] sm:$0xff]
    %v485 = vld [vmem:[%s4 + $0x608] sm:$0xff]
    %v486 = vld [vmem:[%s4 + $0x610] sm:$0xff]
    %v487 = vld [vmem:[%s4 + $0x618] sm:$0xff]
    %v488 = vld [vmem:[%s4 + $0x620] sm:$0xff]
    %v489 = vld [vmem:[%s4 + $0x628] sm:$0xff]
    %v490 = vld [vmem:[%s4 + $0x630] sm:$0xff]
    %v491 = vld [vmem:[%s4 + $0x638] sm:$0xff]
    %v492 = vld [vmem:[%s4 + $0x640] sm:$0xff]
    %v493 = vld [vmem:[%s4 + $0x648] sm:$0xff]
    %v494 = vld [vmem:[%s4 + $0x650] sm:$0xff]
    %v495 = vld [vmem:[%s4 + $0x658] sm:$0xff]
    %v496 = vld [vmem:[%s4 + $0x660] sm:$0xff]
    %v497 = vld [vmem:[%s4 + $0x668] sm:$0xff]
    %v498 = vld [vmem:[%s4 + $0x670] sm:$0xff]
    %v499 = vld [vmem:[%s4 + $0x678] sm:$0xff]
    %v500 = vld [vmem:[%s4 + $0x680] sm:$0xff]
    %v501 = vld [vmem:[%s4 + $0x688] sm:$0xff]
    %v502 = vld [vmem:[%s4 + $0x690] sm:$0xff]
    %v503 = vld [vmem:[%s4 + $0x698] sm:$0xff]
    %v504 = vld [vmem:[%s4 + $0x6a0] sm:$0xff]
    %v505 = vld [vmem:[%s4 + $0x6a8] sm:$0xff]
    %v506 = vld [vmem:[%s4 + $0x6b0] sm:$0xff]
    %v507 = vld [vmem:[%s4 + $0x6b8] sm:$0xff]
    %v508 = vld [vmem:[%s4 + $0x6c0] sm:$0xff]
    %v509 = vld [vmem:[%s4 + $0x6c8] sm:$0xff]
    %v510 = vld [vmem:[%s4 + $0x6d0] sm:$0xff]
    %v511 = vld [vmem:[%s4 + $0x6d8] sm:$0xff]
    %v512 = vld [vmem:[%s4 + $0x6e0] sm:$0xff]
    %v513 = vld [vmem:[%s4 + $0x6e8] sm:$0xff]
    %v514 = vld [vmem:[%s4 + $0x6f0] sm:$0xff]
    %v515 = vld [vmem:[%s4 + $0x6f8] sm:$0xff]
    %v516 = vld [vmem:[%s4 + $0x700] sm:$0xff]
    %v517 = vld [vmem:[%s4 + $0x708] sm:$0xff]
    %v518 = vld [vmem:[%s4 + $0x710] sm:$0xff]
    %v519 = vld [vmem:[%s4 + $0x718] sm:$0xff]
    %v520 = vld [vmem:[%s4 + $0x720] sm:$0xff]
    %v521 = vld [vmem:[%s4 + $0x728] sm:$0xff]
    %v522 = vld [vmem:[%s4 + $0x730] sm:$0xff]
    %v523 = vld [vmem:[%s4 + $0x738] sm:$0xff]
    %v524 = vld [vmem:[%s4 + $0x740] sm:$0xff]
    %v525 = vld [vmem:[%s4 + $0x748] sm:$0xff]
    %v526 = vld [vmem:[%s4 + $0x750] sm:$0xff]
    %v527 = vld [vmem:[%s4 + $0x758] sm:$0xff]
    %v528 = vld [vmem:[%s4 + $0x760] sm:$0xff]
    %v529 = vld [vmem:[%s4 + $0x768] sm:$0xff]
    %v530 = vld [vmem:[%s4 + $0x770] sm:$0xff]
    %v531 = vld [vmem:[%s4 + $0x778] sm:$0xff]
    %v532 = vld [vmem:[%s4 + $0x780] sm:$0xff]
    %v533 = vld [vmem:[%s4 + $0x788] sm:$0xff]
    %v534 = vld [vmem:[%s4 + $0x790] sm:$0xff]
    %v535 = vld [vmem:[%s4 + $0x798] sm:$0xff]
    %v536 = vld [vmem:[%s4 + $0x7a0] sm:$0xff]
    %v537 = vld [vmem:[%s4 + $0x7a8] sm:$0xff]
    %v538 = vld [vmem:[%s4 + $0x7b0] sm:$0xff]
    %v539 = vld [vmem:[%s4 + $0x7b8] sm:$0xff]
    %v540 = vld [vmem:[%s4 + $0x7c0] sm:$0xff]
    %v541 = vld [vmem:[%s4 + $0x7c8] sm:$0xff]
    %v542 = vld [vmem:[%s4 + $0x7d0] sm:$0xff]
    %v543 = vld [vmem:[%s4 + $0x7d8] sm:$0xff]
    %v544 = vld [vmem:[%s4 + $0x7e0] sm:$0xff]
    %v545 = vld [vmem:[%s4 + $0x7e8] sm:$0xff]
    %v546 = vld [vmem:[%s4 + $0x7f0] sm:$0xff]
    %v547 = vld [vmem:[%s4 + $0x7f8] sm:$0xff]
    %v548 = vld [vmem:[%s5] sm:$0x1]
    %v550 = vperm.slane %v548, 0
    %552 = vmatpush.msra.mxu0 %v307
    %553 = vmatpush.msra.mxu0 %v306
    %554 = vmatpush.msra.mxu0 %v305
    %555 = vmatpush.msra.mxu0 %v304
    %556 = vmatpush.msra.mxu0 %v303
    %557 = vmatpush.msra.mxu0 %v302
    %558 = vmatpush.msra.mxu0 %v301
    %559 = vmatpush.msra.mxu0 %v300
    %560 = vmatpush.msra.mxu0 %v299
    %561 = vmatpush.msra.mxu0 %v298
    %562 = vmatpush.msra.mxu0 %v297
    %563 = vmatpush.msra.mxu0 %v296
    %564 = vmatpush.msra.mxu0 %v295
    %565 = vmatpush.msra.mxu0 %v294
    %566 = vmatpush.msra.mxu0 %v293
    %567 = vmatpush.msra.mxu0 %v292
    %568 = vmatmul.f32.gmra.mxu0 %v276
    %v569 = vpop.f32.mrf.mxu0
    %v570 = vadd.f32 %v550, %v569
    %571 = vdwg.mxu0
    %572 = vmatpush.msra.mxu0 %v323
    %573 = vmatpush.msra.mxu0 %v322
    %574 = vmatpush.msra.mxu0 %v321
    %575 = vmatpush.msra.mxu0 %v320
    %576 = vmatpush.msra.mxu0 %v319
    %577 = vmatpush.msra.mxu0 %v318
    %578 = vmatpush.msra.mxu0 %v317
    %579 = vmatpush.msra.mxu0 %v316
    %580 = vmatpush.msra.mxu0 %v315
    %581 = vmatpush.msra.mxu0 %v314
    %582 = vmatpush.msra.mxu0 %v313
    %583 = vmatpush.msra.mxu0 %v312
    %584 = vmatpush.msra.mxu0 %v311
    %585 = vmatpush.msra.mxu0 %v310
    %586 = vmatpush.msra.mxu0 %v309
    %587 = vmatpush.msra.mxu0 %v308
    %588 = vmatmul.f32.gmra.mxu0 %v277
    %v589 = vpop.f32.mrf.mxu0
    %v590 = vadd.f32 %v570, %v589
    %591 = vdwg.mxu0
    %592 = vmatpush.msra.mxu0 %v339
    %593 = vmatpush.msra.mxu0 %v338
    %594 = vmatpush.msra.mxu0 %v337
    %595 = vmatpush.msra.mxu0 %v336
    %596 = vmatpush.msra.mxu0 %v335
    %597 = vmatpush.msra.mxu0 %v334
    %598 = vmatpush.msra.mxu0 %v333
    %599 = vmatpush.msra.mxu0 %v332
    %600 = vmatpush.msra.mxu0 %v331
    %601 = vmatpush.msra.mxu0 %v330
    %602 = vmatpush.msra.mxu0 %v329
    %603 = vmatpush.msra.mxu0 %v328
    %604 = vmatpush.msra.mxu0 %v327
    %605 = vmatpush.msra.mxu0 %v326
    %606 = vmatpush.msra.mxu0 %v325
    %607 = vmatpush.msra.mxu0 %v324
    %608 = vmatmul.f32.gmra.mxu0 %v278
    %v609 = vpop.f32.mrf.mxu0
    %v610 = vadd.f32 %v590, %v609
    %611 = vdwg.mxu0
    %612 = vmatpush.msra.mxu0 %v355
    %613 = vmatpush.msra.mxu0 %v354
    %614 = vmatpush.msra.mxu0 %v353
    %615 = vmatpush.msra.mxu0 %v352
    %616 = vmatpush.msra.mxu0 %v351
    %617 = vmatpush.msra.mxu0 %v350
    %618 = vmatpush.msra.mxu0 %v349
    %619 = vmatpush.msra.mxu0 %v348
    %620 = vmatpush.msra.mxu0 %v347
    %621 = vmatpush.msra.mxu0 %v346
    %622 = vmatpush.msra.mxu0 %v345
    %623 = vmatpush.msra.mxu0 %v344
    %624 = vmatpush.msra.mxu0 %v343
    %625 = vmatpush.msra.mxu0 %v342
    %626 = vmatpush.msra.mxu0 %v341
    %627 = vmatpush.msra.mxu0 %v340
    %628 = vmatmul.f32.gmra.mxu0 %v279
    %v629 = vpop.f32.mrf.mxu0
    %v630 = vadd.f32 %v610, %v629
    %631 = vdwg.mxu0
    %632 = vmatpush.msra.mxu0 %v371
    %633 = vmatpush.msra.mxu0 %v370
    %634 = vmatpush.msra.mxu0 %v369
    %635 = vmatpush.msra.mxu0 %v368
    %636 = vmatpush.msra.mxu0 %v367
    %637 = vmatpush.msra.mxu0 %v366
    %638 = vmatpush.msra.mxu0 %v365
    %639 = vmatpush.msra.mxu0 %v364
    %640 = vmatpush.msra.mxu0 %v363
    %641 = vmatpush.msra.mxu0 %v362
    %642 = vmatpush.msra.mxu0 %v361
    %643 = vmatpush.msra.mxu0 %v360
    %644 = vmatpush.msra.mxu0 %v359
    %645 = vmatpush.msra.mxu0 %v358
    %646 = vmatpush.msra.mxu0 %v357
    %647 = vmatpush.msra.mxu0 %v356
    %648 = vmatmul.f32.gmra.mxu0 %v280
    %v649 = vpop.f32.mrf.mxu0
    %v650 = vadd.f32 %v630, %v649
    %651 = vdwg.mxu0
    %652 = vmatpush.msra.mxu0 %v387
    %653 = vmatpush.msra.mxu0 %v386
    %654 = vmatpush.msra.mxu0 %v385
    %655 = vmatpush.msra.mxu0 %v384
    %656 = vmatpush.msra.mxu0 %v383
    %657 = vmatpush.msra.mxu0 %v382
    %658 = vmatpush.msra.mxu0 %v381
    %659 = vmatpush.msra.mxu0 %v380
    %660 = vmatpush.msra.mxu0 %v379
    %661 = vmatpush.msra.mxu0 %v378
    %662 = vmatpush.msra.mxu0 %v377
    %663 = vmatpush.msra.mxu0 %v376
    %664 = vmatpush.msra.mxu0 %v375
    %665 = vmatpush.msra.mxu0 %v374
    %666 = vmatpush.msra.mxu0 %v373
    %667 = vmatpush.msra.mxu0 %v372
    %668 = vmatmul.f32.gmra.mxu0 %v281
    %v669 = vpop.f32.mrf.mxu0
    %v670 = vadd.f32 %v650, %v669
    %671 = vdwg.mxu0
    %672 = vmatpush.msra.mxu0 %v403
    %673 = vmatpush.msra.mxu0 %v402
    %674 = vmatpush.msra.mxu0 %v401
    %675 = vmatpush.msra.mxu0 %v400
    %676 = vmatpush.msra.mxu0 %v399
    %677 = vmatpush.msra.mxu0 %v398
    %678 = vmatpush.msra.mxu0 %v397
    %679 = vmatpush.msra.mxu0 %v396
    %680 = vmatpush.msra.mxu0 %v395
    %681 = vmatpush.msra.mxu0 %v394
    %682 = vmatpush.msra.mxu0 %v393
    %683 = vmatpush.msra.mxu0 %v392
    %684 = vmatpush.msra.mxu0 %v391
    %685 = vmatpush.msra.mxu0 %v390
    %686 = vmatpush.msra.mxu0 %v389
    %687 = vmatpush.msra.mxu0 %v388
    %688 = vmatmul.f32.gmra.mxu0 %v282
    %v689 = vpop.f32.mrf.mxu0
    %v690 = vadd.f32 %v670, %v689
    %691 = vdwg.mxu0
    %692 = vmatpush.msra.mxu0 %v419
    %693 = vmatpush.msra.mxu0 %v418
    %694 = vmatpush.msra.mxu0 %v417
    %695 = vmatpush.msra.mxu0 %v416
    %696 = vmatpush.msra.mxu0 %v415
    %697 = vmatpush.msra.mxu0 %v414
    %698 = vmatpush.msra.mxu0 %v413
    %699 = vmatpush.msra.mxu0 %v412
    %700 = vmatpush.msra.mxu0 %v411
    %701 = vmatpush.msra.mxu0 %v410
    %702 = vmatpush.msra.mxu0 %v409
    %703 = vmatpush.msra.mxu0 %v408
    %704 = vmatpush.msra.mxu0 %v407
    %705 = vmatpush.msra.mxu0 %v406
    %706 = vmatpush.msra.mxu0 %v405
    %707 = vmatpush.msra.mxu0 %v404
    %708 = vmatmul.f32.gmra.mxu0 %v283
    %v709 = vpop.f32.mrf.mxu0
    %v710 = vadd.f32 %v690, %v709
    %711 = vdwg.mxu0
    %712 = vmatpush.msra.mxu0 %v435
    %713 = vmatpush.msra.mxu0 %v434
    %714 = vmatpush.msra.mxu0 %v433
    %715 = vmatpush.msra.mxu0 %v432
    %716 = vmatpush.msra.mxu0 %v431
    %717 = vmatpush.msra.mxu0 %v430
    %718 = vmatpush.msra.mxu0 %v429
    %719 = vmatpush.msra.mxu0 %v428
    %720 = vmatpush.msra.mxu0 %v427
    %721 = vmatpush.msra.mxu0 %v426
    %722 = vmatpush.msra.mxu0 %v425
    %723 = vmatpush.msra.mxu0 %v424
    %724 = vmatpush.msra.mxu0 %v423
    %725 = vmatpush.msra.mxu0 %v422
    %726 = vmatpush.msra.mxu0 %v421
    %727 = vmatpush.msra.mxu0 %v420
    %728 = vmatmul.f32.gmra.mxu0 %v284
    %v729 = vpop.f32.mrf.mxu0
    %v730 = vadd.f32 %v710, %v729
    %731 = vdwg.mxu0
    %732 = vmatpush.msra.mxu0 %v451
    %733 = vmatpush.msra.mxu0 %v450
    %734 = vmatpush.msra.mxu0 %v449
    %735 = vmatpush.msra.mxu0 %v448
    %736 = vmatpush.msra.mxu0 %v447
    %737 = vmatpush.msra.mxu0 %v446
    %738 = vmatpush.msra.mxu0 %v445
    %739 = vmatpush.msra.mxu0 %v444
    %740 = vmatpush.msra.mxu0 %v443
    %741 = vmatpush.msra.mxu0 %v442
    %742 = vmatpush.msra.mxu0 %v441
    %743 = vmatpush.msra.mxu0 %v440
    %744 = vmatpush.msra.mxu0 %v439
    %745 = vmatpush.msra.mxu0 %v438
    %746 = vmatpush.msra.mxu0 %v437
    %747 = vmatpush.msra.mxu0 %v436
    %748 = vmatmul.f32.gmra.mxu0 %v285
    %v749 = vpop.f32.mrf.mxu0
    %v750 = vadd.f32 %v730, %v749
    %751 = vdwg.mxu0
    %752 = vmatpush.msra.mxu0 %v467
    %753 = vmatpush.msra.mxu0 %v466
    %754 = vmatpush.msra.mxu0 %v465
    %755 = vmatpush.msra.mxu0 %v464
    %756 = vmatpush.msra.mxu0 %v463
    %757 = vmatpush.msra.mxu0 %v462
    %758 = vmatpush.msra.mxu0 %v461
    %759 = vmatpush.msra.mxu0 %v460
    %760 = vmatpush.msra.mxu0 %v459
    %761 = vmatpush.msra.mxu0 %v458
    %762 = vmatpush.msra.mxu0 %v457
    %763 = vmatpush.msra.mxu0 %v456
    %764 = vmatpush.msra.mxu0 %v455
    %765 = vmatpush.msra.mxu0 %v454
    %766 = vmatpush.msra.mxu0 %v453
    %767 = vmatpush.msra.mxu0 %v452
    %768 = vmatmul.f32.gmra.mxu0 %v286
    %v769 = vpop.f32.mrf.mxu0
    %v770 = vadd.f32 %v750, %v769
    %771 = vdwg.mxu0
    %772 = vmatpush.msra.mxu0 %v483
    %773 = vmatpush.msra.mxu0 %v482
    %774 = vmatpush.msra.mxu0 %v481
    %775 = vmatpush.msra.mxu0 %v480
    %776 = vmatpush.msra.mxu0 %v479
    %777 = vmatpush.msra.mxu0 %v478
    %778 = vmatpush.msra.mxu0 %v477
    %779 = vmatpush.msra.mxu0 %v476
    %780 = vmatpush.msra.mxu0 %v475
    %781 = vmatpush.msra.mxu0 %v474
    %782 = vmatpush.msra.mxu0 %v473
    %783 = vmatpush.msra.mxu0 %v472
    %784 = vmatpush.msra.mxu0 %v471
    %785 = vmatpush.msra.mxu0 %v470
    %786 = vmatpush.msra.mxu0 %v469
    %787 = vmatpush.msra.mxu0 %v468
    %788 = vmatmul.f32.gmra.mxu0 %v287
    %v789 = vpop.f32.mrf.mxu0
    %v790 = vadd.f32 %v770, %v789
    %791 = vdwg.mxu0
    %792 = vmatpush.msra.mxu0 %v499
    %793 = vmatpush.msra.mxu0 %v498
    %794 = vmatpush.msra.mxu0 %v497
    %795 = vmatpush.msra.mxu0 %v496
    %796 = vmatpush.msra.mxu0 %v495
    %797 = vmatpush.msra.mxu0 %v494
    %798 = vmatpush.msra.mxu0 %v493
    %799 = vmatpush.msra.mxu0 %v492
    %800 = vmatpush.msra.mxu0 %v491
    %801 = vmatpush.msra.mxu0 %v490
    %802 = vmatpush.msra.mxu0 %v489
    %803 = vmatpush.msra.mxu0 %v488
    %804 = vmatpush.msra.mxu0 %v487
    %805 = vmatpush.msra.mxu0 %v486
    %806 = vmatpush.msra.mxu0 %v485
    %807 = vmatpush.msra.mxu0 %v484
    %808 = vmatmul.f32.gmra.mxu0 %v288
    %v809 = vpop.f32.mrf.mxu0
    %v810 = vadd.f32 %v790, %v809
    %811 = vdwg.mxu0
    %812 = vmatpush.msra.mxu0 %v515
    %813 = vmatpush.msra.mxu0 %v514
    %814 = vmatpush.msra.mxu0 %v513
    %815 = vmatpush.msra.mxu0 %v512
    %816 = vmatpush.msra.mxu0 %v511
    %817 = vmatpush.msra.mxu0 %v510
    %818 = vmatpush.msra.mxu0 %v509
    %819 = vmatpush.msra.mxu0 %v508
    %820 = vmatpush.msra.mxu0 %v507
    %821 = vmatpush.msra.mxu0 %v506
    %822 = vmatpush.msra.mxu0 %v505
    %823 = vmatpush.msra.mxu0 %v504
    %824 = vmatpush.msra.mxu0 %v503
    %825 = vmatpush.msra.mxu0 %v502
    %826 = vmatpush.msra.mxu0 %v501
    %827 = vmatpush.msra.mxu0 %v500
    %828 = vmatmul.f32.gmra.mxu0 %v289
    %v829 = vpop.f32.mrf.mxu0
    %v830 = vadd.f32 %v810, %v829
    %831 = vdwg.mxu0
    %832 = vmatpush.msra.mxu0 %v531
    %833 = vmatpush.msra.mxu0 %v530
    %834 = vmatpush.msra.mxu0 %v529
    %835 = vmatpush.msra.mxu0 %v528
    %836 = vmatpush.msra.mxu0 %v527
    %837 = vmatpush.msra.mxu0 %v526
    %838 = vmatpush.msra.mxu0 %v525
    %839 = vmatpush.msra.mxu0 %v524
    %840 = vmatpush.msra.mxu0 %v523
    %841 = vmatpush.msra.mxu0 %v522
    %842 = vmatpush.msra.mxu0 %v521
    %843 = vmatpush.msra.mxu0 %v520
    %844 = vmatpush.msra.mxu0 %v519
    %845 = vmatpush.msra.mxu0 %v518
    %846 = vmatpush.msra.mxu0 %v517
    %847 = vmatpush.msra.mxu0 %v516
    %848 = vmatmul.f32.gmra.mxu0 %v290
    %v849 = vpop.f32.mrf.mxu0
    %v850 = vadd.f32 %v830, %v849
    %851 = vdwg.mxu0
    %852 = vmatpush.msra.mxu0 %v547
    %853 = vmatpush.msra.mxu0 %v546
    %854 = vmatpush.msra.mxu0 %v545
    %855 = vmatpush.msra.mxu0 %v544
    %856 = vmatpush.msra.mxu0 %v543
    %857 = vmatpush.msra.mxu0 %v542
    %858 = vmatpush.msra.mxu0 %v541
    %859 = vmatpush.msra.mxu0 %v540
    %860 = vmatpush.msra.mxu0 %v539
    %861 = vmatpush.msra.mxu0 %v538
    %862 = vmatpush.msra.mxu0 %v537
    %863 = vmatpush.msra.mxu0 %v536
    %864 = vmatpush.msra.mxu0 %v535
    %865 = vmatpush.msra.mxu0 %v534
    %866 = vmatpush.msra.mxu0 %v533
    %867 = vmatpush.msra.mxu0 %v532
    %868 = vmatmul.f32.gmra.mxu0 %v291
    %v869 = vpop.f32.mrf.mxu0
    %v870 = vadd.f32 %v850, %v869
    %871 = vdwg.mxu0
    %v872 = vmul.f32 %v870, %v870
    %vm873 = vcmask 254976
    %v874 = vsel %vm873, %v872, 0.0
    %875 = vadd.xlane.f32.xlu0 %v874
    %v876 = vpop.xlane.xlu0 %875
    %v877 = vmax.f32 %v876, 1e-24
    %v878 = vrsqrt.pop %v877
    %v879 = vmul.f32 %v878, %v877
    %v880 = vmul.f32 %v879, %v878
    %v881 = vmul.f32 0.5, %v880
    %v882 = vsub.f32 1.5, %v881
    %v883 = vmul.f32 %v878, %v882
    %vm884 = vweird.f32 %v877
    %vm885 = vweird.f32 %v878
    %vm886 = vmor %vm884, %vm885
    %v887 = vsel %vm886, %v878, %v883
    %v888 = vmul.f32 %v870, %v887
    %889 = vst.msk [vmem:[#allocation2] sm:$0x3] %vm873, %v888
    // Predicated region
    $region26: #{projector_forward.1} parent=1 // pred_check
      _
    $region27: #{projector_forward.1} parent=1 // pred_check_branch
      %891 = sbr.rel (0) target = $region29
    $region28: #{projector_forward.1} parent=1 // pred_region
      %893 = vsyncadd [#allocation3], 0
      %s895 = sshll.u32 [#allocation2], 4
      %s896 = int_to_ptr.vmem [resolvable:$true] %s895
      %s897 = sshll.u32 %s6, 4
      %s898 = int_to_ptr.hbm [resolvable:$true] %s897
      %900 = dma.vmem_to_hbm [thread:$0]  %s896, 32, %s898, [#allocation3]
    $region29: #{projector_forward.1} parent=1 // pred_fallthru
      _
    // Predicated region
    $region30: #{projector_forward.1} parent=1 // pred_check
      _
    $region31: #{projector_forward.1} parent=1 // pred_check_branch
      %902 = sbr.rel (0) target = $region33
    $region32: #{projector_forward.1} parent=1 // pred_region
      %904 = dma.done [#allocation3], 32
    $region33: #{projector_forward.1} parent=1 // pred_fallthru
      _
    %905 = vsyncpa [#allocation3], 1

</llo_original>
